<compile_context>
chip_gen: v7x
topology: tpu7x:2x2x1
jax: 0.10.0
libtpu: 0.0.40
codegen_flags: <defaults>
</compile_context>

<pallas_src>
import jax
import jax.numpy as jnp
import numpy as np
from jax.experimental import pallas as pl
from jax.experimental.pallas import tpu as pltpu

LANE = 128  # lane-dense padded feature width


def sage_conv_kernel(x_ref, p_ref, o_ref):
    # x_ref : [N, Fp]          node features, feature dim zero-padded to 128
    # p_ref : [2*Fp + 8, Fp]   rows [0, Fp)    = W_l (lin_l.weight.T, padded)
    #                          rows [Fp, 2Fp)  = W_r (lin_r.weight.T, padded)
    #                          row  2*Fp       = bias (lin_l.bias, padded)
    # o_ref : [N, Fp]
    x = x_ref[...]
    n, fp = x.shape

    # Ring-graph mean aggregation as two XLU sublane rotations (no MXU pass,
    # no N x N adjacency operand):  agg_i = 0.5 * (x_{i-1} + x_{i+1}).
    agg = 0.5 * (pltpu.roll(x, 1, axis=0) + pltpu.roll(x, n - 1, axis=0))

    # Single fused matmul on the MXU:  [agg | x] @ [W_l ; W_r]  (+ bias).
    h = jnp.concatenate([agg, x], axis=-1)                # [N, 2*Fp]
    w_cat = p_ref[pl.ds(0, 2 * fp), :]                    # [2*Fp, Fp]
    bias = p_ref[pl.ds(2 * fp, 1), :]                     # [1, Fp]
    out = jnp.dot(h, w_cat, preferred_element_type=jnp.float32) + bias
    o_ref[...] = out.astype(o_ref.dtype)


@jax.jit
def sage_conv(x, w_l, w_r, b):
    n, f_in = x.shape
    f_out = w_l.shape[1]
    fp = LANE  # pad both feature dims to one lane-dense width

    # Lane-dense, zero-padded activation (padding is numerically inert).
    x_pad = jnp.zeros((n, fp), jnp.float32).at[:, :f_in].set(x)

    # Pack W_l, W_r and the bias into ONE VMEM operand (single DMA, single
    # double-buffer allocation instead of three tiny ones).
    params = jnp.zeros((2 * fp + 8, fp), jnp.float32)
    params = params.at[:f_in, :f_out].set(w_l)
    params = params.at[fp:fp + f_in, :f_out].set(w_r)
    params = params.at[2 * fp, :f_out].set(b.reshape(-1))

    out_pad = pl.pallas_call(
        sage_conv_kernel,
        out_shape=jax.ShapeDtypeStruct((n, fp), jnp.float32),
        # Tiny problem: whole arrays resident in VMEM, no grid.
        in_specs=[
            pl.BlockSpec(memory_space=pltpu.MemorySpace.VMEM),  # x_pad
            pl.BlockSpec(memory_space=pltpu.MemorySpace.VMEM),  # packed params
        ],
        out_specs=pl.BlockSpec(memory_space=pltpu.MemorySpace.VMEM),
    )(x_pad, params)

    return out_pad[:, :f_out]


def reference_sage(x, w_l, w_r, b):
    # Pure-JAX reference: ring-graph mean aggregation + SAGEConv linear maps.
    agg = 0.5 * (jnp.roll(x, 1, axis=0) + jnp.roll(x, -1, axis=0))
    return agg @ w_l + x @ w_r + b


if __name__ == "__main__":
    key = jax.random.PRNGKey(0)
    k_x, k_wl, k_wr, k_b = jax.random.split(key, 4)

    N_NODES, F_IN, F_OUT = 16, 12, 12

    x = jax.random.normal(k_x, (N_NODES, F_IN), dtype=jnp.float32)
    # Deterministic parameter init (Glorot-ish scale), stored as [F_in, F_out].
    w_l = jax.random.normal(k_wl, (F_IN, F_OUT), dtype=jnp.float32) * (1.0 / np.sqrt(F_IN))
    w_r = jax.random.normal(k_wr, (F_IN, F_OUT), dtype=jnp.float32) * (1.0 / np.sqrt(F_IN))
    b = jax.random.normal(k_b, (1, F_OUT), dtype=jnp.float32) * 0.1

    out = sage_conv(x, w_l, w_r, b)
    jax.block_until_ready(out)

    ref = reference_sage(x, w_l, w_r, b)
    np.testing.assert_allclose(np.asarray(out), np.asarray(ref), rtol=1e-5, atol=1e-5)

    print("KERNEL_OK")
</pallas_src>

<mosaic_0001>
module attributes {stable_mosaic.version = 11 : i64} {
  func.func @sage_conv_kernel(%arg0: memref<16x128xf32, #tpu.memory_space<vmem>>, %arg1: memref<264x128xf32, #tpu.memory_space<vmem>>, %arg2: memref<16x128xf32, #tpu.memory_space<vmem>>) attributes {dimension_semantics = [], scalar_prefetch = 0 : i64, scratch_operands = 0 : i64, tpu.core_type = #tpu.core_type<tc>} {
    %c0 = arith.constant 0 : index
    %c0_0 = arith.constant 0 : index
    %0 = vector.load %arg0[%c0, %c0_0] : memref<16x128xf32, #tpu.memory_space<vmem>>, vector<16x128xf32>
    %c1_i32 = arith.constant 1 : i32
    %1 = tpu.dynamic_rotate %0 by %c1_i32 dim 0 : vector<16x128xf32>, i32 -> vector<16x128xf32>
    %c15_i32 = arith.constant 15 : i32
    %2 = tpu.dynamic_rotate %0 by %c15_i32 dim 0 : vector<16x128xf32>, i32 -> vector<16x128xf32>
    %3 = arith.addf %1, %2 : vector<16x128xf32>
    %cst = arith.constant 5.000000e-01 : f32
    %4 = vector.broadcast %cst : f32 to vector<16x128xf32>
    %5 = arith.mulf %4, %3 : vector<16x128xf32>
    %6 = tpu.concatenate %5, %0 in 1 : vector<16x128xf32>, vector<16x128xf32> -> vector<16x256xf32>
    %c0_1 = arith.constant 0 : index
    %c0_2 = arith.constant 0 : index
    %7 = vector.load %arg1[%c0_1, %c0_2] : memref<264x128xf32, #tpu.memory_space<vmem>>, vector<256x128xf32>
    %c256 = arith.constant 256 : index
    %c0_3 = arith.constant 0 : index
    %8 = vector.load %arg1[%c256, %c0_3] : memref<264x128xf32, #tpu.memory_space<vmem>>, vector<1x128xf32>
    %cst_4 = arith.constant dense<0.000000e+00> : vector<16x128xf32>
    %9 = tpu.matmul %6, %7, %cst_4 {dimension_numbers = #tpu.dot_dimension_numbers<[1], [0], [0], [1], [0, 0, 1, 1], [], []>} : vector<16x256xf32>, vector<256x128xf32>, vector<16x128xf32> -> vector<16x128xf32>
    %10 = vector.broadcast %8 : vector<1x128xf32> to vector<16x128xf32>
    %11 = arith.addf %9, %10 : vector<16x128xf32>
    %c0_5 = arith.constant 0 : index
    %c0_6 = arith.constant 0 : index
    %12 = vector.load %arg2[%c0_5, %c0_6] : memref<16x128xf32, #tpu.memory_space<vmem>>, vector<16x128xf32>
    tpu.vector_store %arg2[%c0_5, %c0_6], %11 {strides = array<i32>} : memref<16x128xf32, #tpu.memory_space<vmem>>, vector<16x128xf32>,
    return
  }
}

</mosaic_0001>

<llo_original>
// kernel: sage_conv.1
$region0: #{sage_conv.1}
  #allocation0 [shape = 'u32[]', space=smem, size = 0x4, offset = 0x4, fixed_abs, tag = 'smem constant byte address 0x4 - core index']
  #allocation1 [shape = 'u32[144,128]{1,0:T(1,128)}', space=vmem, size = 0x12000, scoped, tag = 'internal scratch']
  %s0 = inlined_call_operand.vmem [shape: f32[16,128], index: 0, kind: input, shape index: {}]
  %s1 = inlined_call_operand.vmem [shape: f32[264,128], index: 1, kind: input, shape index: {}]
  %s2 = inlined_call_operand.hbm [shape: f32[16,128], index: 2, kind: output, shape index: {}]
  %s3 = sld [smem:[#allocation0]]
  $region18: #{sage_conv.1} parent=0
    _
  %s5 = ssub.s32 1, %s3
  %s6 = scalar_select 0, %s5, %s3
  $region1: #{sage_conv.1} parent=0
    #allocation2 [shape = 'u8[8192]{0}', space=vmem, size = 0x2000, scoped, tag = 'output window, operand 0, single buffered']
    #allocation3 [shape = 's32[1]{0}', space=sflag, size = 0x4, scoped, tag = 'scoped memory for sage_conv.1']
    %7 = vsyncpa [#allocation3], 0
    // Predicated region
    $region2: #{sage_conv.1} parent=1 // pred_check
      _
    $region3: #{sage_conv.1} parent=1 // pred_check_branch
      %9 = sbr.rel (0) target = $region5
    $region4: #{sage_conv.1} parent=1 // pred_region
      _
    $region5: #{sage_conv.1} parent=1 // pred_fallthru
      _
    // Predicated region
    $region6: #{sage_conv.1} parent=1 // pred_check
      _
    $region7: #{sage_conv.1} parent=1 // pred_check_branch
      %11 = sbr.rel (0) target = $region9
    $region8: #{sage_conv.1} parent=1 // pred_region
      _
    $region9: #{sage_conv.1} parent=1 // pred_fallthru
      _
    %v12 = vld [vmem:[%s0] sm:$0xff]
    %v13 = vld [vmem:[%s0 + $0x8] sm:$0xff]
    %v14 = vrot.slane %v12, 7
    %v15 = vrot.slane %v13, 7
    %v16 = vlaneseq
    %v17 = vshrl.u32 %v16, 7
    %vm18 = vcmp.lt.s32.totalorder %v17, 1
    %v19 = vsel %vm18, %v14, %v15
    %v20 = vsel %vm18, %v15, %v14
    %v21 = vrot.slane %v12, 1
    %v22 = vrot.slane %v13, 1
    %vm23 = vcmp.lt.s32.totalorder %v17, 7
    %v24 = vsel %vm23, %v21, %v22
    %v25 = vsel %vm23, %v22, %v21
    %v26 = vadd.f32 %v20, %v24
    %v27 = vadd.f32 %v19, %v25
    %v28 = vmul.f32 %v26, 0.5
    %v29 = vmul.f32 %v27, 0.5
    %v30 = vld [vmem:[%s1] sm:$0xff]
    %v31 = vld [vmem:[%s1 + $0x8] sm:$0xff]
    %v32 = vld [vmem:[%s1 + $0x10] sm:$0xff]
    %v33 = vld [vmem:[%s1 + $0x18] sm:$0xff]
    %v34 = vld [vmem:[%s1 + $0x20] sm:$0xff]
    %v35 = vld [vmem:[%s1 + $0x28] sm:$0xff]
    %v36 = vld [vmem:[%s1 + $0x30] sm:$0xff]
    %v37 = vld [vmem:[%s1 + $0x38] sm:$0xff]
    %v38 = vld [vmem:[%s1 + $0x40] sm:$0xff]
    %v39 = vld [vmem:[%s1 + $0x48] sm:$0xff]
    %v40 = vld [vmem:[%s1 + $0x50] sm:$0xff]
    %v41 = vld [vmem:[%s1 + $0x58] sm:$0xff]
    %v42 = vld [vmem:[%s1 + $0x60] sm:$0xff]
    %v43 = vld [vmem:[%s1 + $0x68] sm:$0xff]
    %v44 = vld [vmem:[%s1 + $0x70] sm:$0xff]
    %v45 = vld [vmem:[%s1 + $0x78] sm:$0xff]
    %v46 = vld [vmem:[%s1 + $0x80] sm:$0xff]
    %v47 = vld [vmem:[%s1 + $0x88] sm:$0xff]
    %v48 = vld [vmem:[%s1 + $0x90] sm:$0xff]
    %v49 = vld [vmem:[%s1 + $0x98] sm:$0xff]
    %v50 = vld [vmem:[%s1 + $0xa0] sm:$0xff]
    %v51 = vld [vmem:[%s1 + $0xa8] sm:$0xff]
    %v52 = vld [vmem:[%s1 + $0xb0] sm:$0xff]
    %v53 = vld [vmem:[%s1 + $0xb8] sm:$0xff]
    %v54 = vld [vmem:[%s1 + $0xc0] sm:$0xff]
    %v55 = vld [vmem:[%s1 + $0xc8] sm:$0xff]
    %v56 = vld [vmem:[%s1 + $0xd0] sm:$0xff]
    %v57 = vld [vmem:[%s1 + $0xd8] sm:$0xff]
    %v58 = vld [vmem:[%s1 + $0xe0] sm:$0xff]
    %v59 = vld [vmem:[%s1 + $0xe8] sm:$0xff]
    %v60 = vld [vmem:[%s1 + $0xf0] sm:$0xff]
    %v61 = vld [vmem:[%s1 + $0xf8] sm:$0xff]
    %v62 = vld [vmem:[%s1 + $0x100] sm:$0x1]
    %v63 = vlaneseq
    %v64 = vshrl.u32 %v63, 7
    %v65 = vsub.s32 0, %v64
    %v66 = vrot.slane %v62, %v65
    %67 = vmatprep.subr.mxu0 0.0
    %68 = vmatpush1.msra.mxu0 %v30
    %69 = vmatprep.subr.mxu0 0.0
    %70 = vmatpush1.msra.mxu0 %v31
    %71 = vmatprep.subr.mxu0 0.0
    %72 = vmatpush1.msra.mxu0 %v32
    %73 = vmatprep.subr.mxu0 0.0
    %74 = vmatpush1.msra.mxu0 %v33
    %75 = vmatprep.subr.mxu0 0.0
    %76 = vmatpush1.msra.mxu0 %v34
    %77 = vmatprep.subr.mxu0 0.0
    %78 = vmatpush1.msra.mxu0 %v35
    %79 = vmatprep.subr.mxu0 0.0
    %80 = vmatpush1.msra.mxu0 %v36
    %81 = vmatprep.subr.mxu0 0.0
    %82 = vmatpush1.msra.mxu0 %v37
    %83 = vmatprep.subr.mxu0 0.0
    %84 = vmatpush1.msra.mxu0 %v38
    %85 = vmatprep.subr.mxu0 0.0
    %86 = vmatpush1.msra.mxu0 %v39
    %87 = vmatprep.subr.mxu0 0.0
    %88 = vmatpush1.msra.mxu0 %v40
    %89 = vmatprep.subr.mxu0 0.0
    %90 = vmatpush1.msra.mxu0 %v41
    %91 = vmatprep.subr.mxu0 0.0
    %92 = vmatpush1.msra.mxu0 %v42
    %93 = vmatprep.subr.mxu0 0.0
    %94 = vmatpush1.msra.mxu0 %v43
    %95 = vmatprep.subr.mxu0 0.0
    %96 = vmatpush1.msra.mxu0 %v44
    %97 = vmatprep.subr.mxu0 0.0
    %98 = vmatpush1.msra.mxu0 %v45
    %99 = vmatprep.subr.mxu0 0.0
    %100 = vmatpush1.msra.mxu0 %v46
    %101 = vmatprep.subr.mxu0 0.0
    %102 = vmatpush1.msra.mxu0 %v47
    %103 = vmatprep.subr.mxu0 0.0
    %104 = vmatpush1.msra.mxu0 %v48
    %105 = vmatprep.subr.mxu0 0.0
    %106 = vmatpush1.msra.mxu0 %v49
    %107 = vmatprep.subr.mxu0 0.0
    %108 = vmatpush1.msra.mxu0 %v50
    %109 = vmatprep.subr.mxu0 0.0
    %110 = vmatpush1.msra.mxu0 %v51
    %111 = vmatprep.subr.mxu0 0.0
    %112 = vmatpush1.msra.mxu0 %v52
    %113 = vmatprep.subr.mxu0 0.0
    %114 = vmatpush1.msra.mxu0 %v53
    %115 = vmatprep.subr.mxu0 0.0
    %116 = vmatpush1.msra.mxu0 %v54
    %117 = vmatprep.subr.mxu0 0.0
    %118 = vmatpush1.msra.mxu0 %v55
    %119 = vmatprep.subr.mxu0 0.0
    %120 = vmatpush1.msra.mxu0 %v56
    %121 = vmatprep.subr.mxu0 0.0
    %122 = vmatpush1.msra.mxu0 %v57
    %123 = vmatprep.subr.mxu0 0.0
    %124 = vmatpush1.msra.mxu0 %v58
    %125 = vmatprep.subr.mxu0 0.0
    %126 = vmatpush1.msra.mxu0 %v59
    %127 = vmatprep.subr.mxu0 0.0
    %128 = vmatpush1.msra.mxu0 %v60
    %129 = vmatprep.subr.mxu0 0.0
    %130 = vmatpush1.msra.mxu0 %v61
    %131 = vmatprep.mubr.f32.mxu0 %v12
    %132 = vmatmul.mubr.f32.gmra.mrb[0].mxu0 %v28
    %v133 = vpop.f32.mrb[0].mxu0
    %v134 = vadd.f32 %v66, %v133
    %v135 = vpop.f32.mrb[0].mxu0
    %136 = vmatprep.mubr.f32.mxu0 %v13
    %137 = vmatmul.mubr.f32.gmra.mrb[0].mxu0 %v29
    %v138 = vpop.f32.mrb[0].mxu0
    %v139 = vadd.f32 %v66, %v138
    %v140 = vpop.f32.mrb[0].mxu0
    %141 = vdwg.mxu0
    %142 = vst [vmem:[#allocation2] sm:$0xff] %v134
    %143 = vst [vmem:[#allocation2 + $0x8] sm:$0xff] %v139
    // Predicated region
    $region10: #{sage_conv.1} parent=1 // pred_check
      _
    $region11: #{sage_conv.1} parent=1 // pred_check_branch
      %145 = sbr.rel (0) target = $region13
    $region12: #{sage_conv.1} parent=1 // pred_region
      %s147 = ssub.s32 256, 256
      %148 = vsyncadd [#allocation3], %s147
      %s149 = sshll.u32 [#allocation2], 4
      %s150 = int_to_ptr.vmem [resolvable:$true] %s149
      %155 = dma.vmem_to_hbm [thread:$0]  %s150, 256, %s2, [#allocation3], 128, 128, 8
    $region13: #{sage_conv.1} parent=1 // pred_fallthru
      _
    // Predicated region
    $region14: #{sage_conv.1} parent=1 // pred_check
      _
    $region15: #{sage_conv.1} parent=1 // pred_check_branch
      %157 = sbr.rel (0) target = $region17
    $region16: #{sage_conv.1} parent=1 // pred_region
      %158 = dma.done [#allocation3], 256
    $region17: #{sage_conv.1} parent=1 // pred_fallthru
      _
    %159 = vsyncpa [#allocation3], 1

</llo_original>
